<compile_context>
chip_gen: v7x
topology: tpu7x:2x2x1
jax: 0.10.0
libtpu: 0.0.40
codegen_flags: <defaults>
</compile_context>

<pallas_src>
import jax
import jax.numpy as jnp
from jax.experimental import pallas as pl
from jax.experimental.pallas import tpu as pltpu


def circle_mlp_kernel(x_ref, w12_ref, b12_ref, w3_ref, b3_ref, o_ref):
    # Fused layer_1 + layer_2 (feature-major): (10,2) @ (2,T) + (10,1) -> (10,T)
    h = jnp.dot(w12_ref[...], x_ref[...], preferred_element_type=jnp.float32) + b12_ref[...]
    # ReLU (matches the PyTorch forward: relu after layer_2)
    h = jnp.maximum(h, 0.0)
    # layer_3: (1,10) @ (10,T) + (1,1) -> (1,T)
    o_ref[...] = (jnp.dot(w3_ref[...], h, preferred_element_type=jnp.float32)
                  + b3_ref[...]).astype(o_ref.dtype)


def _round_up(x, m):
    return ((x + m - 1) // m) * m


def circle_model_forward(x, params, tile_n=2048):
    """x: (N, 2) float32 -> (N, 1) float32.

    params are PyTorch-layout: (W1 (10,2), b1 (10,), W2 (10,10), b2 (10,),
    W3 (1,10), b3 (1,)).  All heavy compute runs inside one Pallas kernel.
    """
    w1, b1, w2, b2, w3, b3 = params
    n = x.shape[0]

    # ---- offline layer_1/layer_2 fusion (no activation between them) ----
    w12 = w2 @ w1                              # (10, 2)
    b12 = (w2 @ b1 + b2).reshape(10, 1)        # (10, 1) column for lane-broadcast
    w3m = w3                                   # (1, 10)
    b3m = b3.reshape(1, 1)                     # (1, 1)

    # ---- lane-dense (feature-major) layout + batch padding ----
    tile = min(int(tile_n), _round_up(max(n, 1), 128))
    tile = _round_up(tile, 128)
    n_pad = _round_up(n, tile)

    x_fm = x.astype(jnp.float32).T             # (2, N)
    if n_pad != n:
        x_fm = jnp.pad(x_fm, ((0, 0), (0, n_pad - n)))

    grid = (n_pad // tile,)
    out_shape = jax.ShapeDtypeStruct((1, n_pad), jnp.float32)

    out_fm = pl.pallas_call(
        circle_mlp_kernel,
        out_shape=out_shape,
        grid=grid,
        in_specs=[
            # streamed batch tiles (auto double-buffered)
            pl.BlockSpec((2, tile), lambda i: (0, i), memory_space=pltpu.VMEM),
            # weights / biases: resident, constant index_map
            pl.BlockSpec(w12.shape, lambda i: (0, 0), memory_space=pltpu.VMEM),
            pl.BlockSpec(b12.shape, lambda i: (0, 0), memory_space=pltpu.VMEM),
            pl.BlockSpec(w3m.shape, lambda i: (0, 0), memory_space=pltpu.VMEM),
            pl.BlockSpec(b3m.shape, lambda i: (0, 0), memory_space=pltpu.VMEM),
        ],
        out_specs=pl.BlockSpec((1, tile), lambda i: (0, i), memory_space=pltpu.VMEM),
        compiler_params=pltpu.CompilerParams(
            dimension_semantics=("parallel",),
        ),
    )(x_fm, w12, b12, w3m, b3m)

    # back to (N, 1) row-major, dropping batch padding
    return out_fm[:, :n].T


def init_params(key):
    """Deterministic init mimicking nn.Linear's U(-1/sqrt(fan_in), 1/sqrt(fan_in)).

    Weights stored PyTorch-style as (out_features, in_features); biases (out,).
    """
    def linear_init(k, fan_in, fan_out):
        kw, kb = jax.random.split(k)
        bound = 1.0 / jnp.sqrt(jnp.float32(fan_in))
        w = jax.random.uniform(kw, (fan_out, fan_in), jnp.float32, -bound, bound)
        b = jax.random.uniform(kb, (fan_out,), jnp.float32, -bound, bound)
        return w, b

    k1, k2, k3 = jax.random.split(key, 3)
    w1, b1 = linear_init(k1, 2, 10)
    w2, b2 = linear_init(k2, 10, 10)
    w3, b3 = linear_init(k3, 10, 1)
    return (w1, b1, w2, b2, w3, b3)


def reference_forward(x, params):
    """Pure-JAX reference matching the unfused PyTorch forward."""
    w1, b1, w2, b2, w3, b3 = params
    h1 = x @ w1.T + b1
    h2 = jnp.maximum(h1 @ w2.T + b2, 0.0)
    return h2 @ w3.T + b3


if __name__ == "__main__":
    key = jax.random.PRNGKey(0)
    k_params, k_x = jax.random.split(key)
    params = init_params(k_params)

    batch = 8
    x = jax.random.normal(k_x, (batch, 2), dtype=jnp.float32)

    out = circle_model_forward(x, params)
    out = jax.block_until_ready(out)

    ref = reference_forward(x, params)
    assert out.shape == (batch, 1), out.shape
    # Fused W1/W2 changes summation order -> tiny f32 differences only.
    assert jnp.allclose(out, ref, atol=1e-5, rtol=1e-5), "mismatch vs JAX reference"

    print("KERNEL_OK")
</pallas_src>

<mosaic_0001>
module attributes {stable_mosaic.version = 11 : i64} {
  func.func @circle_mlp_kernel(%arg0: i32, %arg1: memref<2x128xf32, #tpu.memory_space<vmem>>, %arg2: memref<10x2xf32, #tpu.memory_space<vmem>>, %arg3: memref<10x1xf32, #tpu.memory_space<vmem>>, %arg4: memref<1x10xf32, #tpu.memory_space<vmem>>, %arg5: memref<1x1xf32, #tpu.memory_space<vmem>>, %arg6: memref<1x128xf32, #tpu.memory_space<vmem>>) attributes {dimension_semantics = [#tpu.dimension_semantics<parallel>], iteration_bounds = array<i64: 1>, scalar_prefetch = 0 : i64, scratch_operands = 0 : i64, tpu.core_type = #tpu.core_type<tc>, window_params = [{transform_indices = @transform_0, window_bounds = array<i64: 2, 128>}, {pipeline_mode = #tpu.pipeline_mode<synchronous>, transform_indices = @transform_1, window_bounds = array<i64: 10, 2>}, {pipeline_mode = #tpu.pipeline_mode<synchronous>, transform_indices = @transform_2, window_bounds = array<i64: 10, 1>}, {pipeline_mode = #tpu.pipeline_mode<synchronous>, transform_indices = @transform_3, window_bounds = array<i64: 1, 10>}, {pipeline_mode = #tpu.pipeline_mode<synchronous>, transform_indices = @transform_4, window_bounds = array<i64: 1, 1>}, {transform_indices = @transform_5, window_bounds = array<i64: 1, 128>}]} {
    %c0 = arith.constant 0 : index
    %c0_0 = arith.constant 0 : index
    %0 = vector.load %arg2[%c0, %c0_0] : memref<10x2xf32, #tpu.memory_space<vmem>>, vector<10x2xf32>
    %c0_1 = arith.constant 0 : index
    %c0_2 = arith.constant 0 : index
    %1 = vector.load %arg1[%c0_1, %c0_2] : memref<2x128xf32, #tpu.memory_space<vmem>>, vector<2x128xf32>
    %cst = arith.constant dense<0.000000e+00> : vector<10x128xf32>
    %2 = tpu.matmul %0, %1, %cst {dimension_numbers = #tpu.dot_dimension_numbers<[1], [0], [0], [1], [0, 0, 1, 1], [], []>} : vector<10x2xf32>, vector<2x128xf32>, vector<10x128xf32> -> vector<10x128xf32>
    %c0_3 = arith.constant 0 : index
    %c0_4 = arith.constant 0 : index
    %3 = vector.load %arg3[%c0_3, %c0_4] : memref<10x1xf32, #tpu.memory_space<vmem>>, vector<10x1xf32>
    %4 = vector.broadcast %3 : vector<10x1xf32> to vector<10x128xf32>
    %5 = arith.addf %2, %4 : vector<10x128xf32>
    %cst_5 = arith.constant 0.000000e+00 : f32
    %6 = vector.broadcast %cst_5 : f32 to vector<10x128xf32>
    %7 = arith.maximumf %5, %6 : vector<10x128xf32>
    %c0_6 = arith.constant 0 : index
    %c0_7 = arith.constant 0 : index
    %8 = vector.load %arg4[%c0_6, %c0_7] : memref<1x10xf32, #tpu.memory_space<vmem>>, vector<1x10xf32>
    %cst_8 = arith.constant dense<0.000000e+00> : vector<1x128xf32>
    %9 = tpu.matmul %8, %7, %cst_8 {dimension_numbers = #tpu.dot_dimension_numbers<[1], [0], [0], [1], [0, 0, 1, 1], [], []>} : vector<1x10xf32>, vector<10x128xf32>, vector<1x128xf32> -> vector<1x128xf32>
    %c0_9 = arith.constant 0 : index
    %c0_10 = arith.constant 0 : index
    %10 = vector.load %arg5[%c0_9, %c0_10] : memref<1x1xf32, #tpu.memory_space<vmem>>, vector<1x1xf32>
    %11 = vector.broadcast %10 : vector<1x1xf32> to vector<1x128xf32>
    %12 = arith.addf %9, %11 : vector<1x128xf32>
    %c0_11 = arith.constant 0 : index
    %c0_12 = arith.constant 0 : index
    %13 = vector.load %arg6[%c0_11, %c0_12] : memref<1x128xf32, #tpu.memory_space<vmem>>, vector<1x128xf32>
    tpu.vector_store %arg6[%c0_11, %c0_12], %12 {strides = array<i32>} : memref<1x128xf32, #tpu.memory_space<vmem>>, vector<1x128xf32>,
    return
  }
  func.func @transform_0(%arg0: i32) -> (i32, i32) {
    %c0_i32 = arith.constant 0 : i32
    %c0_i32_0 = arith.constant 0 : i32
    return %c0_i32, %arg0 : i32, i32
  }
  func.func @transform_1(%arg0: i32) -> (i32, i32) {
    %c0_i32 = arith.constant 0 : i32
    %c0_i32_0 = arith.constant 0 : i32
    %c0_i32_1 = arith.constant 0 : i32
    return %c0_i32, %c0_i32_0 : i32, i32
  }
  func.func @transform_2(%arg0: i32) -> (i32, i32) {
    %c0_i32 = arith.constant 0 : i32
    %c0_i32_0 = arith.constant 0 : i32
    %c0_i32_1 = arith.constant 0 : i32
    return %c0_i32, %c0_i32_0 : i32, i32
  }
  func.func @transform_3(%arg0: i32) -> (i32, i32) {
    %c0_i32 = arith.constant 0 : i32
    %c0_i32_0 = arith.constant 0 : i32
    %c0_i32_1 = arith.constant 0 : i32
    return %c0_i32, %c0_i32_0 : i32, i32
  }
  func.func @transform_4(%arg0: i32) -> (i32, i32) {
    %c0_i32 = arith.constant 0 : i32
    %c0_i32_0 = arith.constant 0 : i32
    %c0_i32_1 = arith.constant 0 : i32
    return %c0_i32, %c0_i32_0 : i32, i32
  }
  func.func @transform_5(%arg0: i32) -> (i32, i32) {
    %c0_i32 = arith.constant 0 : i32
    %c0_i32_0 = arith.constant 0 : i32
    return %c0_i32, %arg0 : i32, i32
  }
}

</mosaic_0001>

<llo_original>
// kernel: tpu_custom_call.1
$region0: #{tpu_custom_call.1}
  #allocation0 [shape = 'u32[]', space=smem, size = 0x4, offset = 0x4, fixed_abs, tag = 'smem constant byte address 0x4 - core index']
  #allocation1 [shape = 'u32[144,128]{1,0:T(1,128)}', space=vmem, size = 0x12000, scoped, tag = 'internal scratch']
  #allocation2 [shape = 'f32[1,1]{1,0:T(1,128)S(1)}', space=vmem, size = 0x200, scoped, tag = 'scoped memory for tpu_custom_call.1']
  %s0 = inlined_call_operand.vmem [shape: f32[2,128], index: 0, kind: input, shape index: {}]
  %s1 = inlined_call_operand.vmem [shape: f32[10,2], index: 1, kind: input, shape index: {}]
  %s2 = inlined_call_operand.vmem [shape: f32[10,1], index: 2, kind: input, shape index: {}]
  %s3 = inlined_call_operand.vmem [shape: f32[1,10], index: 3, kind: input, shape index: {}]
  %s4 = inlined_call_operand.<no memory space> [shape: f32[1,1], index: 4, kind: input, shape index: {}]
  %s5 = inlined_call_operand.hbm [shape: f32[1,128], index: 5, kind: output, shape index: {}]
  %s6 = sld [smem:[#allocation0]]
  $region30: #{tpu_custom_call.1} parent=0
    _
  %s8 = ssub.s32 1, %s6
  %s9 = scalar_select 0, %s8, %s6
  %v10 = vstv %s4
  %11 = vst [vmem:[#allocation2] sm:$0x1] %v10
  $region1: #{tpu_custom_call.1} parent=0
    #allocation3 [shape = 'u8[512]{0}', space=vmem, size = 0x400, scoped, tag = 'output window, operand 0, single buffered']
    #allocation4 [shape = 's32[1]{0}', space=sflag, size = 0x4, scoped, tag = 'scoped memory for tpu_custom_call.1']
    %12 = vsyncpa [#allocation4], 0
    // Predicated region
    $region2: #{tpu_custom_call.1} parent=1 // pred_check
      _
    $region3: #{tpu_custom_call.1} parent=1 // pred_check_branch
      %14 = sbr.rel (0) target = $region5
    $region4: #{tpu_custom_call.1} parent=1 // pred_region
      _
    $region5: #{tpu_custom_call.1} parent=1 // pred_fallthru
      _
    // Predicated region
    $region6: #{tpu_custom_call.1} parent=1 // pred_check
      _
    $region7: #{tpu_custom_call.1} parent=1 // pred_check_branch
      %16 = sbr.rel (0) target = $region9
    $region8: #{tpu_custom_call.1} parent=1 // pred_region
      _
    $region9: #{tpu_custom_call.1} parent=1 // pred_fallthru
      _
    // Predicated region
    $region10: #{tpu_custom_call.1} parent=1 // pred_check
      _
    $region11: #{tpu_custom_call.1} parent=1 // pred_check_branch
      %18 = sbr.rel (0) target = $region13
    $region12: #{tpu_custom_call.1} parent=1 // pred_region
      _
    $region13: #{tpu_custom_call.1} parent=1 // pred_fallthru
      _
    // Predicated region
    $region14: #{tpu_custom_call.1} parent=1 // pred_check
      _
    $region15: #{tpu_custom_call.1} parent=1 // pred_check_branch
      %20 = sbr.rel (0) target = $region17
    $region16: #{tpu_custom_call.1} parent=1 // pred_region
      _
    $region17: #{tpu_custom_call.1} parent=1 // pred_fallthru
      _
    // Predicated region
    $region18: #{tpu_custom_call.1} parent=1 // pred_check
      _
    $region19: #{tpu_custom_call.1} parent=1 // pred_check_branch
      %22 = sbr.rel (0) target = $region21
    $region20: #{tpu_custom_call.1} parent=1 // pred_region
      _
    $region21: #{tpu_custom_call.1} parent=1 // pred_fallthru
      _
    %v23 = vld [vmem:[%s1] sm:$0xff]
    %v24 = vld [vmem:[%s1 + $0x8] sm:$0x3]
    %v25 = vld [vmem:[%s0] sm:$0x3]
    %v26 = vld [vmem:[%s2] sm:$0xff]
    %v27 = vld [vmem:[%s2 + $0x8] sm:$0x3]
    %29 = vset.pattern.permute.xlu0 0
    %30 = vperm.xlu0 %29, %v26
    %v31 = vpop.permute.xlu0 %30
    %34 = vset.pattern.permute.xlu0 0
    %35 = vperm.xlu0 %34, %v27
    %v36 = vpop.permute.xlu0 %35
    %vm38 = vcmask 15360
    %v40 = vsel %vm38, %v23, 0
    %v43 = vsel %vm38, %v24, 0
    %vm45 = vcmask 1041408
    %v47 = vsel %vm45, %v25, 0
    %49 = vmatprep.subr.mxu0 0.0
    %50 = vmatpush1.msra.mxu0 %v47
    %51 = vmatprep.subr.mxu0 0.0
    %52 = vmatpush1.msra.mxu0 0.0
    %53 = vmatprep.subr.mxu0 0.0
    %54 = vmatpush1.msra.mxu0 0.0
    %55 = vmatprep.subr.mxu0 0.0
    %56 = vmatpush1.msra.mxu0 0.0
    %57 = vmatprep.subr.mxu0 0.0
    %58 = vmatpush1.msra.mxu0 0.0
    %59 = vmatprep.subr.mxu0 0.0
    %60 = vmatpush1.msra.mxu0 0.0
    %61 = vmatprep.subr.mxu0 0.0
    %62 = vmatpush1.msra.mxu0 0.0
    %63 = vmatprep.subr.mxu0 0.0
    %64 = vmatpush1.msra.mxu0 0.0
    %65 = vmatprep.subr.mxu0 0.0
    %66 = vmatpush1.msra.mxu0 0.0
    %67 = vmatprep.subr.mxu0 0.0
    %68 = vmatpush1.msra.mxu0 0.0
    %69 = vmatprep.subr.mxu0 0.0
    %70 = vmatpush1.msra.mxu0 0.0
    %71 = vmatprep.subr.mxu0 0.0
    %72 = vmatpush1.msra.mxu0 0.0
    %73 = vmatprep.subr.mxu0 0.0
    %74 = vmatpush1.msra.mxu0 0.0
    %75 = vmatprep.subr.mxu0 0.0
    %76 = vmatpush1.msra.mxu0 0.0
    %77 = vmatprep.subr.mxu0 0.0
    %78 = vmatpush1.msra.mxu0 0.0
    %79 = vmatprep.subr.mxu0 0.0
    %80 = vmatpush1.msra.mxu0 0.0
    %81 = vmatprep.subr.mxu0 0.0
    %82 = vmatpush1.msra.mxu0 0.0
    %83 = vmatprep.subr.mxu0 0.0
    %84 = vmatpush1.msra.mxu0 0.0
    %85 = vmatprep.subr.mxu0 0.0
    %86 = vmatpush1.msra.mxu0 0.0
    %87 = vmatprep.subr.mxu0 0.0
    %88 = vmatpush1.msra.mxu0 0.0
    %89 = vmatprep.subr.mxu0 0.0
    %90 = vmatpush1.msra.mxu0 0.0
    %91 = vmatprep.subr.mxu0 0.0
    %92 = vmatpush1.msra.mxu0 0.0
    %93 = vmatprep.subr.mxu0 0.0
    %94 = vmatpush1.msra.mxu0 0.0
    %95 = vmatprep.subr.mxu0 0.0
    %96 = vmatpush1.msra.mxu0 0.0
    %97 = vmatprep.subr.mxu0 0.0
    %98 = vmatpush1.msra.mxu0 0.0
    %99 = vmatprep.subr.mxu0 0.0
    %100 = vmatpush1.msra.mxu0 0.0
    %101 = vmatprep.subr.mxu0 0.0
    %102 = vmatpush1.msra.mxu0 0.0
    %103 = vmatprep.subr.mxu0 0.0
    %104 = vmatpush1.msra.mxu0 0.0
    %105 = vmatprep.subr.mxu0 0.0
    %106 = vmatpush1.msra.mxu0 0.0
    %107 = vmatprep.subr.mxu0 0.0
    %108 = vmatpush1.msra.mxu0 0.0
    %109 = vmatprep.subr.mxu0 0.0
    %110 = vmatpush1.msra.mxu0 0.0
    %111 = vmatprep.subr.mxu0 0.0
    %112 = vmatpush1.msra.mxu0 0.0
    %113 = vmatprep.mubr.f32.mxu0 0.0
    %114 = vmatmul.mubr.f32.gmra.mrb[0].mxu0 %v40
    %v115 = vpop.f32.mrb[0].mxu0
    %v116 = vadd.f32 %v31, %v115
    %v117 = vpop.f32.mrb[0].mxu0
    %118 = vmatprep.mubr.f32.mxu0 0.0
    %119 = vmatmul.mubr.f32.gmra.mrb[0].mxu0 %v43
    %v120 = vpop.f32.mrb[0].mxu0
    %v121 = vadd.f32 %v36, %v120
    %v122 = vpop.f32.mrb[0].mxu0
    %123 = vdwg.mxu0
    %v124 = vmax.f32 %v116, 0.0
    %v125 = vmax.f32 %v121, 0.0
    %v126 = vld [vmem:[%s3] sm:$0x1]
    %v127 = vld [vmem:[#allocation2] sm:$0x1]
    %129 = vset.pattern.permute.xlu0 0
    %130 = vperm.xlu0 %129, %v127
    %v131 = vpop.permute.xlu0 %130
    %v133 = vlaneseq
    %v134 = vshrl.u32 %v133, 7
    %v135 = vsub.s32 0, %v134
    %v136 = vrot.slane %v131, %v135
    %vm137 = vcmask 80896
    %v139 = vsel %vm137, %v126, 0
    %v142 = vsel %vm45, %v125, 0
    %144 = vmatprep.subr.mxu0 0.0
    %145 = vmatpush1.msra.mxu0 %v124
    %146 = vmatprep.subr.mxu0 0.0
    %147 = vmatpush1.msra.mxu0 %v142
    %148 = vmatprep.subr.mxu0 0.0
    %149 = vmatpush1.msra.mxu0 0.0
    %150 = vmatprep.subr.mxu0 0.0
    %151 = vmatpush1.msra.mxu0 0.0
    %152 = vmatprep.subr.mxu0 0.0
    %153 = vmatpush1.msra.mxu0 0.0
    %154 = vmatprep.subr.mxu0 0.0
    %155 = vmatpush1.msra.mxu0 0.0
    %156 = vmatprep.subr.mxu0 0.0
    %157 = vmatpush1.msra.mxu0 0.0
    %158 = vmatprep.subr.mxu0 0.0
    %159 = vmatpush1.msra.mxu0 0.0
    %160 = vmatprep.subr.mxu0 0.0
    %161 = vmatpush1.msra.mxu0 0.0
    %162 = vmatprep.subr.mxu0 0.0
    %163 = vmatpush1.msra.mxu0 0.0
    %164 = vmatprep.subr.mxu0 0.0
    %165 = vmatpush1.msra.mxu0 0.0
    %166 = vmatprep.subr.mxu0 0.0
    %167 = vmatpush1.msra.mxu0 0.0
    %168 = vmatprep.subr.mxu0 0.0
    %169 = vmatpush1.msra.mxu0 0.0
    %170 = vmatprep.subr.mxu0 0.0
    %171 = vmatpush1.msra.mxu0 0.0
    %172 = vmatprep.subr.mxu0 0.0
    %173 = vmatpush1.msra.mxu0 0.0
    %174 = vmatprep.subr.mxu0 0.0
    %175 = vmatpush1.msra.mxu0 0.0
    %176 = vmatprep.subr.mxu0 0.0
    %177 = vmatpush1.msra.mxu0 0.0
    %178 = vmatprep.subr.mxu0 0.0
    %179 = vmatpush1.msra.mxu0 0.0
    %180 = vmatprep.subr.mxu0 0.0
    %181 = vmatpush1.msra.mxu0 0.0
    %182 = vmatprep.subr.mxu0 0.0
    %183 = vmatpush1.msra.mxu0 0.0
    %184 = vmatprep.subr.mxu0 0.0
    %185 = vmatpush1.msra.mxu0 0.0
    %186 = vmatprep.subr.mxu0 0.0
    %187 = vmatpush1.msra.mxu0 0.0
    %188 = vmatprep.subr.mxu0 0.0
    %189 = vmatpush1.msra.mxu0 0.0
    %190 = vmatprep.subr.mxu0 0.0
    %191 = vmatpush1.msra.mxu0 0.0
    %192 = vmatprep.subr.mxu0 0.0
    %193 = vmatpush1.msra.mxu0 0.0
    %194 = vmatprep.subr.mxu0 0.0
    %195 = vmatpush1.msra.mxu0 0.0
    %196 = vmatprep.subr.mxu0 0.0
    %197 = vmatpush1.msra.mxu0 0.0
    %198 = vmatprep.subr.mxu0 0.0
    %199 = vmatpush1.msra.mxu0 0.0
    %200 = vmatprep.subr.mxu0 0.0
    %201 = vmatpush1.msra.mxu0 0.0
    %202 = vmatprep.subr.mxu0 0.0
    %203 = vmatpush1.msra.mxu0 0.0
    %204 = vmatprep.subr.mxu0 0.0
    %205 = vmatpush1.msra.mxu0 0.0
    %206 = vmatprep.subr.mxu0 0.0
    %207 = vmatpush1.msra.mxu0 0.0
    %208 = vmatprep.mubr.f32.mxu0 0.0
    %209 = vmatmul.mubr.f32.gmra.mrb[0].mxu0 %v139
    %v210 = vpop.f32.mrb[0].mxu0
    %v211 = vadd.f32 %v136, %v210
    %v212 = vpop.f32.mrb[0].mxu0
    %213 = vdwg.mxu0
    %214 = vst [vmem:[#allocation3] sm:$0x1] %v211
    // Predicated region
    $region22: #{tpu_custom_call.1} parent=1 // pred_check
      _
    $region23: #{tpu_custom_call.1} parent=1 // pred_check_branch
      %216 = sbr.rel (0) target = $region25
    $region24: #{tpu_custom_call.1} parent=1 // pred_region
      %s218 = ssub.s32 16, 16
      %219 = vsyncadd [#allocation4], %s218
      %s221 = sshll.u32 [#allocation3], 4
      %s222 = int_to_ptr.vmem [resolvable:$true] %s221
      %224 = dma.vmem_to_hbm [thread:$0]  %s222, 16, %s5, [#allocation4]
    $region25: #{tpu_custom_call.1} parent=1 // pred_fallthru
      _
    // Predicated region
    $region26: #{tpu_custom_call.1} parent=1 // pred_check
      _
    $region27: #{tpu_custom_call.1} parent=1 // pred_check_branch
      %226 = sbr.rel (0) target = $region29
    $region28: #{tpu_custom_call.1} parent=1 // pred_region
      %227 = dma.done [#allocation4], 16
    $region29: #{tpu_custom_call.1} parent=1 // pred_fallthru
      _
    %228 = vsyncpa [#allocation4], 1

</llo_original>
